<compile_context>
chip_gen: v7x
topology: tpu7x:2x2x1
jax: 0.10.0
libtpu: 0.0.40
codegen_flags: <defaults>
</compile_context>

<pallas_src>
import functools

import numpy as np

import jax
import jax.numpy as jnp
from jax import lax
from jax.experimental import pallas as pl
from jax.experimental.pallas import tpu as pltpu


def _round_up(x, m):
    return (x + m - 1) // m * m


def ffm_kernel(masks_ref, x1_ref, x2_ref, w1_ref, b1_ref, w2_ref, b2_ref,
               o_ref, patches_ref, *, W, P, Cp):
    """One batch element per grid step.

    Block shapes:
      masks:   (9, 1, P)   0/1 edge-validity mask per conv tap
      x1/x2:   (1, Cp, P)  feature maps, spatial flattened into lanes
      w:       (Cp, 9*Cp)  BN-scaled im2col weights, k = (ky*3+kx)*Cp + ci
      b:       (Cp, 1)     folded BN bias
      o:       (1, Cp, P)
      patches_ref: VMEM scratch (9*Cp, P), reused by both convs.
    """

    def conv_bn_relu(x, w_ref, b_ref):
        # im2col: 9 shifted + masked copies of x stacked along sublanes.
        for tap in range(9):
            dy, dx = tap // 3 - 1, tap % 3 - 1
            shift = (-(dy * W + dx)) % P           # shifted[p] = x[p + dy*W + dx]
            shifted = pltpu.roll(x, shift, axis=1) if shift else x
            patches_ref[tap * Cp:(tap + 1) * Cp, :] = shifted * masks_ref[tap]
        # Single MXU matmul per conv: (Cp, 9Cp) @ (9Cp, P) -> (Cp, P).
        acc = jnp.dot(w_ref[...], patches_ref[...],
                      preferred_element_type=jnp.float32)
        return jnp.maximum(acc + b_ref[...], 0.0)   # bias + ReLU

    prod = x1_ref[0] * x2_ref[0]                    # (Cp, P), lane-dense
    h1 = conv_bn_relu(prod, w1_ref, b1_ref)
    h2 = conv_bn_relu(h1, w2_ref, b2_ref)
    o_ref[0] = h2.astype(o_ref.dtype)


def _make_tap_masks(H, W):
    """(9, 1, H*W) float32 0/1 masks: 1 where (y+dy, x+dx) is in bounds."""
    ys = np.arange(H)[:, None]
    xs = np.arange(W)[None, :]
    masks = np.zeros((9, 1, H * W), np.float32)
    for tap in range(9):
        dy, dx = tap // 3 - 1, tap % 3 - 1
        valid = ((ys + dy >= 0) & (ys + dy < H) &
                 (xs + dx >= 0) & (xs + dx < W))
        masks[tap, 0, :] = valid.reshape(-1).astype(np.float32)
    return jnp.asarray(masks)


def prepare_ffm_params(params, eps=1e-5):
    """One-time parameter prep: fold BN scale into the conv weights and build
    the (Cp, 9*Cp) im2col weight matrices + (Cp, 1) biases from OIHW."""
    C = params["conv1_w"].shape[0]
    Cp = _round_up(C, 8)

    def prep(w_oihw, gamma, beta, mean, var):
        scale = gamma / jnp.sqrt(var + eps)                     # (C,)
        bias = beta - mean * scale                              # (C,)
        w = w_oihw.astype(jnp.float32) * scale[:, None, None, None]
        w = jnp.pad(w, ((0, Cp - C), (0, Cp - C), (0, 0), (0, 0)))
        bias = jnp.pad(bias.astype(jnp.float32), (0, Cp - C))
        # (O, I, ky, kx) -> (O, ky, kx, I) -> (O, 9*I); k = (ky*3+kx)*Cp + ci
        wm = jnp.transpose(w, (0, 2, 3, 1)).reshape(Cp, 9 * Cp)
        return wm, bias.reshape(Cp, 1)

    wm1, b1 = prep(params["conv1_w"], params["bn1_gamma"], params["bn1_beta"],
                   params["bn1_mean"], params["bn1_var"])
    wm2, b2 = prep(params["conv2_w"], params["bn2_gamma"], params["bn2_beta"],
                   params["bn2_mean"], params["bn2_var"])
    return {"wm1": wm1, "b1": b1, "wm2": wm2, "b2": b2, "C": C, "Cp": Cp}


def ffm_forward(x1_nchw, x2_nchw, prep):
    """FFM forward. Inputs/outputs are NCHW like PyTorch."""
    B, C, H, W = x1_nchw.shape
    Cp, P = prep["Cp"], H * W
    pad_c = Cp - C

    x1 = x1_nchw.astype(jnp.float32)
    x2 = x2_nchw.astype(jnp.float32)
    if pad_c:
        x1 = jnp.pad(x1, ((0, 0), (0, pad_c), (0, 0), (0, 0)))
        x2 = jnp.pad(x2, ((0, 0), (0, pad_c), (0, 0), (0, 0)))
    x1 = x1.reshape(B, Cp, P)       # NCHW -> (B, C, H*W): pure reshape
    x2 = x2.reshape(B, Cp, P)

    masks = _make_tap_masks(H, W)
    kernel = functools.partial(ffm_kernel, W=W, P=P, Cp=Cp)

    out = pl.pallas_call(
        kernel,
        out_shape=jax.ShapeDtypeStruct((B, Cp, P), jnp.float32),
        grid_spec=pltpu.PrefetchScalarGridSpec(
            num_scalar_prefetch=0,
            grid=(B,),
            in_specs=[
                pl.BlockSpec((9, 1, P), lambda b: (0, 0, 0)),     # masks
                pl.BlockSpec((1, Cp, P), lambda b: (b, 0, 0)),    # x1
                pl.BlockSpec((1, Cp, P), lambda b: (b, 0, 0)),    # x2
                pl.BlockSpec((Cp, 9 * Cp), lambda b: (0, 0)),     # w1 (BN-scaled)
                pl.BlockSpec((Cp, 1), lambda b: (0, 0)),          # b1
                pl.BlockSpec((Cp, 9 * Cp), lambda b: (0, 0)),     # w2 (BN-scaled)
                pl.BlockSpec((Cp, 1), lambda b: (0, 0)),          # b2
            ],
            out_specs=pl.BlockSpec((1, Cp, P), lambda b: (b, 0, 0)),
            scratch_shapes=[pltpu.VMEM((9 * Cp, P), jnp.float32)],
        ),
        compiler_params=pltpu.CompilerParams(
            dimension_semantics=("parallel",)),
    )(masks, x1, x2, prep["wm1"], prep["b1"], prep["wm2"], prep["b2"])

    out = out.reshape(B, Cp, H, W)
    return out[:, :C] if pad_c else out


def ffm_reference(x1, x2, params, eps=1e-5):
    """Pure-JAX reference (eval-mode BN), NCHW in/out."""
    dn = ("NCHW", "OIHW", "NCHW")

    def block(x, w, gamma, beta, mean, var):
        y = lax.conv_general_dilated(x, w, (1, 1), "SAME",
                                     dimension_numbers=dn)
        c = (None, slice(None), None, None)
        y = (y - mean[c]) / jnp.sqrt(var + eps)[c] * gamma[c] + beta[c]
        return jnp.maximum(y, 0.0)

    out = block(x1 * x2, params["conv1_w"], params["bn1_gamma"],
                params["bn1_beta"], params["bn1_mean"], params["bn1_var"])
    out = block(out, params["conv2_w"], params["bn2_gamma"],
                params["bn2_beta"], params["bn2_mean"], params["bn2_var"])
    return out


if __name__ == "__main__":
    B, C, H, W = 2, 4, 16, 16

    key = jax.random.PRNGKey(0)
    keys = jax.random.split(key, 8)

    x1 = jax.random.normal(keys[0], (B, C, H, W), jnp.float32)
    x2 = jax.random.normal(keys[1], (B, C, H, W), jnp.float32)

    params = {
        # conv weights in PyTorch OIHW layout, bias=False
        "conv1_w": 0.1 * jax.random.normal(keys[2], (C, C, 3, 3), jnp.float32),
        "conv2_w": 0.1 * jax.random.normal(keys[3], (C, C, 3, 3), jnp.float32),
        # BatchNorm params (deterministic, non-trivial)
        "bn1_gamma": 1.0 + 0.1 * jax.random.normal(keys[4], (C,), jnp.float32),
        "bn1_beta": 0.05 * jax.random.normal(keys[5], (C,), jnp.float32),
        "bn1_mean": 0.02 * jnp.arange(C, dtype=jnp.float32),
        "bn1_var": 1.0 + 0.01 * jnp.arange(C, dtype=jnp.float32),
        "bn2_gamma": 1.0 + 0.1 * jax.random.normal(keys[6], (C,), jnp.float32),
        "bn2_beta": 0.05 * jax.random.normal(keys[7], (C,), jnp.float32),
        "bn2_mean": 0.03 * jnp.arange(C, dtype=jnp.float32),
        "bn2_var": 1.0 + 0.02 * jnp.arange(C, dtype=jnp.float32),
    }

    prep = prepare_ffm_params(params)            # one-time parameter prep
    out = jax.block_until_ready(ffm_forward(x1, x2, prep))
    ref = jax.block_until_ready(ffm_reference(x1, x2, params))

    assert out.shape == (B, C, H, W)
    err = jnp.max(jnp.abs(out - ref))
    assert jnp.allclose(out, ref, atol=2e-4, rtol=2e-4), f"max abs err = {err}"

    print("KERNEL_OK")
</pallas_src>

<mosaic_0001>
module attributes {stable_mosaic.version = 11 : i64} {
  func.func @ffm_kernel(%arg0: i32, %arg1: memref<9x1x256xf32, #tpu.memory_space<vmem>>, %arg2: memref<1x8x256xf32, #tpu.memory_space<vmem>>, %arg3: memref<1x8x256xf32, #tpu.memory_space<vmem>>, %arg4: memref<8x72xf32, #tpu.memory_space<vmem>>, %arg5: memref<8x1xf32, #tpu.memory_space<vmem>>, %arg6: memref<8x72xf32, #tpu.memory_space<vmem>>, %arg7: memref<8x1xf32, #tpu.memory_space<vmem>>, %arg8: memref<1x8x256xf32, #tpu.memory_space<vmem>>, %arg9: memref<72x256xf32, #tpu.memory_space<vmem>>) attributes {dimension_semantics = [#tpu.dimension_semantics<parallel>], iteration_bounds = array<i64: 2>, scalar_prefetch = 0 : i64, scratch_operands = 1 : i64, tpu.core_type = #tpu.core_type<tc>, window_params = [{pipeline_mode = #tpu.pipeline_mode<synchronous>, transform_indices = @transform_0, window_bounds = array<i64: 9, 1, 256>}, {transform_indices = @transform_1, window_bounds = array<i64: 1, 8, 256>}, {transform_indices = @transform_2, window_bounds = array<i64: 1, 8, 256>}, {pipeline_mode = #tpu.pipeline_mode<synchronous>, transform_indices = @transform_3, window_bounds = array<i64: 8, 72>}, {pipeline_mode = #tpu.pipeline_mode<synchronous>, transform_indices = @transform_4, window_bounds = array<i64: 8, 1>}, {pipeline_mode = #tpu.pipeline_mode<synchronous>, transform_indices = @transform_5, window_bounds = array<i64: 8, 72>}, {pipeline_mode = #tpu.pipeline_mode<synchronous>, transform_indices = @transform_6, window_bounds = array<i64: 8, 1>}, {transform_indices = @transform_7, window_bounds = array<i64: 1, 8, 256>}]} {
    %c0 = arith.constant 0 : index
    %c0_0 = arith.constant 0 : index
    %c0_1 = arith.constant 0 : index
    %0 = vector.load %arg2[%c0, %c0_0, %c0_1] : memref<1x8x256xf32, #tpu.memory_space<vmem>>, vector<1x8x256xf32>
    %1 = vector.shape_cast %0 : vector<1x8x256xf32> to vector<8x256xf32>
    %c0_2 = arith.constant 0 : index
    %c0_3 = arith.constant 0 : index
    %c0_4 = arith.constant 0 : index
    %2 = vector.load %arg3[%c0_2, %c0_3, %c0_4] : memref<1x8x256xf32, #tpu.memory_space<vmem>>, vector<1x8x256xf32>
    %3 = vector.shape_cast %2 : vector<1x8x256xf32> to vector<8x256xf32>
    %4 = arith.mulf %1, %3 : vector<8x256xf32>
    %c17_i32 = arith.constant 17 : i32
    %5 = tpu.dynamic_rotate %4 by %c17_i32 dim 1 : vector<8x256xf32>, i32 -> vector<8x256xf32>
    %c0_5 = arith.constant 0 : index
    %c0_6 = arith.constant 0 : index
    %c0_7 = arith.constant 0 : index
    %6 = vector.load %arg1[%c0_5, %c0_6, %c0_7] : memref<9x1x256xf32, #tpu.memory_space<vmem>>, vector<1x1x256xf32>
    %7 = vector.shape_cast %6 : vector<1x1x256xf32> to vector<1x256xf32>
    %8 = vector.broadcast %7 : vector<1x256xf32> to vector<8x256xf32>
    %9 = arith.mulf %5, %8 : vector<8x256xf32>
    %c0_8 = arith.constant 0 : index
    %c0_9 = arith.constant 0 : index
    %10 = vector.load %arg9[%c0_8, %c0_9] : memref<72x256xf32, #tpu.memory_space<vmem>>, vector<8x256xf32>
    tpu.vector_store %arg9[%c0_8, %c0_9], %9 {strides = array<i32>} : memref<72x256xf32, #tpu.memory_space<vmem>>, vector<8x256xf32>,
    %c16_i32 = arith.constant 16 : i32
    %11 = tpu.dynamic_rotate %4 by %c16_i32 dim 1 : vector<8x256xf32>, i32 -> vector<8x256xf32>
    %c1 = arith.constant 1 : index
    %c0_10 = arith.constant 0 : index
    %c0_11 = arith.constant 0 : index
    %12 = vector.load %arg1[%c1, %c0_10, %c0_11] : memref<9x1x256xf32, #tpu.memory_space<vmem>>, vector<1x1x256xf32>
    %13 = vector.shape_cast %12 : vector<1x1x256xf32> to vector<1x256xf32>
    %14 = vector.broadcast %13 : vector<1x256xf32> to vector<8x256xf32>
    %15 = arith.mulf %11, %14 : vector<8x256xf32>
    %c8 = arith.constant 8 : index
    %c0_12 = arith.constant 0 : index
    %16 = vector.load %arg9[%c8, %c0_12] : memref<72x256xf32, #tpu.memory_space<vmem>>, vector<8x256xf32>
    tpu.vector_store %arg9[%c8, %c0_12], %15 {strides = array<i32>} : memref<72x256xf32, #tpu.memory_space<vmem>>, vector<8x256xf32>,
    %c15_i32 = arith.constant 15 : i32
    %17 = tpu.dynamic_rotate %4 by %c15_i32 dim 1 : vector<8x256xf32>, i32 -> vector<8x256xf32>
    %c2 = arith.constant 2 : index
    %c0_13 = arith.constant 0 : index
    %c0_14 = arith.constant 0 : index
    %18 = vector.load %arg1[%c2, %c0_13, %c0_14] : memref<9x1x256xf32, #tpu.memory_space<vmem>>, vector<1x1x256xf32>
    %19 = vector.shape_cast %18 : vector<1x1x256xf32> to vector<1x256xf32>
    %20 = vector.broadcast %19 : vector<1x256xf32> to vector<8x256xf32>
    %21 = arith.mulf %17, %20 : vector<8x256xf32>
    %c16 = arith.constant 16 : index
    %c0_15 = arith.constant 0 : index
    %22 = vector.load %arg9[%c16, %c0_15] : memref<72x256xf32, #tpu.memory_space<vmem>>, vector<8x256xf32>
    tpu.vector_store %arg9[%c16, %c0_15], %21 {strides = array<i32>} : memref<72x256xf32, #tpu.memory_space<vmem>>, vector<8x256xf32>,
    %c1_i32 = arith.constant 1 : i32
    %23 = tpu.dynamic_rotate %4 by %c1_i32 dim 1 : vector<8x256xf32>, i32 -> vector<8x256xf32>
    %c3 = arith.constant 3 : index
    %c0_16 = arith.constant 0 : index
    %c0_17 = arith.constant 0 : index
    %24 = vector.load %arg1[%c3, %c0_16, %c0_17] : memref<9x1x256xf32, #tpu.memory_space<vmem>>, vector<1x1x256xf32>
    %25 = vector.shape_cast %24 : vector<1x1x256xf32> to vector<1x256xf32>
    %26 = vector.broadcast %25 : vector<1x256xf32> to vector<8x256xf32>
    %27 = arith.mulf %23, %26 : vector<8x256xf32>
    %c24 = arith.constant 24 : index
    %c0_18 = arith.constant 0 : index
    %28 = vector.load %arg9[%c24, %c0_18] : memref<72x256xf32, #tpu.memory_space<vmem>>, vector<8x256xf32>
    tpu.vector_store %arg9[%c24, %c0_18], %27 {strides = array<i32>} : memref<72x256xf32, #tpu.memory_space<vmem>>, vector<8x256xf32>,
    %c4 = arith.constant 4 : index
    %c0_19 = arith.constant 0 : index
    %c0_20 = arith.constant 0 : index
    %29 = vector.load %arg1[%c4, %c0_19, %c0_20] : memref<9x1x256xf32, #tpu.memory_space<vmem>>, vector<1x1x256xf32>
    %30 = vector.shape_cast %29 : vector<1x1x256xf32> to vector<1x256xf32>
    %31 = vector.broadcast %30 : vector<1x256xf32> to vector<8x256xf32>
    %32 = arith.mulf %4, %31 : vector<8x256xf32>
    %c32 = arith.constant 32 : index
    %c0_21 = arith.constant 0 : index
    %33 = vector.load %arg9[%c32, %c0_21] : memref<72x256xf32, #tpu.memory_space<vmem>>, vector<8x256xf32>
    tpu.vector_store %arg9[%c32, %c0_21], %32 {strides = array<i32>} : memref<72x256xf32, #tpu.memory_space<vmem>>, vector<8x256xf32>,
    %c255_i32 = arith.constant 255 : i32
    %34 = tpu.dynamic_rotate %4 by %c255_i32 dim 1 : vector<8x256xf32>, i32 -> vector<8x256xf32>
    %c5 = arith.constant 5 : index
    %c0_22 = arith.constant 0 : index
    %c0_23 = arith.constant 0 : index
    %35 = vector.load %arg1[%c5, %c0_22, %c0_23] : memref<9x1x256xf32, #tpu.memory_space<vmem>>, vector<1x1x256xf32>
    %36 = vector.shape_cast %35 : vector<1x1x256xf32> to vector<1x256xf32>
    %37 = vector.broadcast %36 : vector<1x256xf32> to vector<8x256xf32>
    %38 = arith.mulf %34, %37 : vector<8x256xf32>
    %c40 = arith.constant 40 : index
    %c0_24 = arith.constant 0 : index
    %39 = vector.load %arg9[%c40, %c0_24] : memref<72x256xf32, #tpu.memory_space<vmem>>, vector<8x256xf32>
    tpu.vector_store %arg9[%c40, %c0_24], %38 {strides = array<i32>} : memref<72x256xf32, #tpu.memory_space<vmem>>, vector<8x256xf32>,
    %c241_i32 = arith.constant 241 : i32
    %40 = tpu.dynamic_rotate %4 by %c241_i32 dim 1 : vector<8x256xf32>, i32 -> vector<8x256xf32>
    %c6 = arith.constant 6 : index
    %c0_25 = arith.constant 0 : index
    %c0_26 = arith.constant 0 : index
    %41 = vector.load %arg1[%c6, %c0_25, %c0_26] : memref<9x1x256xf32, #tpu.memory_space<vmem>>, vector<1x1x256xf32>
    %42 = vector.shape_cast %41 : vector<1x1x256xf32> to vector<1x256xf32>
    %43 = vector.broadcast %42 : vector<1x256xf32> to vector<8x256xf32>
    %44 = arith.mulf %40, %43 : vector<8x256xf32>
    %c48 = arith.constant 48 : index
    %c0_27 = arith.constant 0 : index
    %45 = vector.load %arg9[%c48, %c0_27] : memref<72x256xf32, #tpu.memory_space<vmem>>, vector<8x256xf32>
    tpu.vector_store %arg9[%c48, %c0_27], %44 {strides = array<i32>} : memref<72x256xf32, #tpu.memory_space<vmem>>, vector<8x256xf32>,
    %c240_i32 = arith.constant 240 : i32
    %46 = tpu.dynamic_rotate %4 by %c240_i32 dim 1 : vector<8x256xf32>, i32 -> vector<8x256xf32>
    %c7 = arith.constant 7 : index
    %c0_28 = arith.constant 0 : index
    %c0_29 = arith.constant 0 : index
    %47 = vector.load %arg1[%c7, %c0_28, %c0_29] : memref<9x1x256xf32, #tpu.memory_space<vmem>>, vector<1x1x256xf32>
    %48 = vector.shape_cast %47 : vector<1x1x256xf32> to vector<1x256xf32>
    %49 = vector.broadcast %48 : vector<1x256xf32> to vector<8x256xf32>
    %50 = arith.mulf %46, %49 : vector<8x256xf32>
    %c56 = arith.constant 56 : index
    %c0_30 = arith.constant 0 : index
    %51 = vector.load %arg9[%c56, %c0_30] : memref<72x256xf32, #tpu.memory_space<vmem>>, vector<8x256xf32>
    tpu.vector_store %arg9[%c56, %c0_30], %50 {strides = array<i32>} : memref<72x256xf32, #tpu.memory_space<vmem>>, vector<8x256xf32>,
    %c239_i32 = arith.constant 239 : i32
    %52 = tpu.dynamic_rotate %4 by %c239_i32 dim 1 : vector<8x256xf32>, i32 -> vector<8x256xf32>
    %c8_31 = arith.constant 8 : index
    %c0_32 = arith.constant 0 : index
    %c0_33 = arith.constant 0 : index
    %53 = vector.load %arg1[%c8_31, %c0_32, %c0_33] : memref<9x1x256xf32, #tpu.memory_space<vmem>>, vector<1x1x256xf32>
    %54 = vector.shape_cast %53 : vector<1x1x256xf32> to vector<1x256xf32>
    %55 = vector.broadcast %54 : vector<1x256xf32> to vector<8x256xf32>
    %56 = arith.mulf %52, %55 : vector<8x256xf32>
    %c64 = arith.constant 64 : index
    %c0_34 = arith.constant 0 : index
    %57 = vector.load %arg9[%c64, %c0_34] : memref<72x256xf32, #tpu.memory_space<vmem>>, vector<8x256xf32>
    tpu.vector_store %arg9[%c64, %c0_34], %56 {strides = array<i32>} : memref<72x256xf32, #tpu.memory_space<vmem>>, vector<8x256xf32>,
    %c0_35 = arith.constant 0 : index
    %c0_36 = arith.constant 0 : index
    %58 = vector.load %arg4[%c0_35, %c0_36] : memref<8x72xf32, #tpu.memory_space<vmem>>, vector<8x72xf32>
    %c0_37 = arith.constant 0 : index
    %c0_38 = arith.constant 0 : index
    %59 = vector.load %arg9[%c0_37, %c0_38] : memref<72x256xf32, #tpu.memory_space<vmem>>, vector<72x256xf32>
    %cst = arith.constant dense<0.000000e+00> : vector<8x256xf32>
    %60 = tpu.matmul %58, %59, %cst {dimension_numbers = #tpu.dot_dimension_numbers<[1], [0], [0], [1], [0, 0, 1, 1], [], []>} : vector<8x72xf32>, vector<72x256xf32>, vector<8x256xf32> -> vector<8x256xf32>
    %c0_39 = arith.constant 0 : index
    %c0_40 = arith.constant 0 : index
    %61 = vector.load %arg5[%c0_39, %c0_40] : memref<8x1xf32, #tpu.memory_space<vmem>>, vector<8x1xf32>
    %62 = vector.broadcast %61 : vector<8x1xf32> to vector<8x256xf32>
    %63 = arith.addf %60, %62 : vector<8x256xf32>
    %cst_41 = arith.constant 0.000000e+00 : f32
    %64 = vector.broadcast %cst_41 : f32 to vector<8x256xf32>
    %65 = arith.maximumf %63, %64 : vector<8x256xf32>
    %c17_i32_42 = arith.constant 17 : i32
    %66 = tpu.dynamic_rotate %65 by %c17_i32_42 dim 1 : vector<8x256xf32>, i32 -> vector<8x256xf32>
    %c0_43 = arith.constant 0 : index
    %c0_44 = arith.constant 0 : index
    %c0_45 = arith.constant 0 : index
    %67 = vector.load %arg1[%c0_43, %c0_44, %c0_45] : memref<9x1x256xf32, #tpu.memory_space<vmem>>, vector<1x1x256xf32>
    %68 = vector.shape_cast %67 : vector<1x1x256xf32> to vector<1x256xf32>
    %69 = vector.broadcast %68 : vector<1x256xf32> to vector<8x256xf32>
    %70 = arith.mulf %66, %69 : vector<8x256xf32>
    %c0_46 = arith.constant 0 : index
    %c0_47 = arith.constant 0 : index
    %71 = vector.load %arg9[%c0_46, %c0_47] : memref<72x256xf32, #tpu.memory_space<vmem>>, vector<8x256xf32>
    tpu.vector_store %arg9[%c0_46, %c0_47], %70 {strides = array<i32>} : memref<72x256xf32, #tpu.memory_space<vmem>>, vector<8x256xf32>,
    %c16_i32_48 = arith.constant 16 : i32
    %72 = tpu.dynamic_rotate %65 by %c16_i32_48 dim 1 : vector<8x256xf32>, i32 -> vector<8x256xf32>
    %c1_49 = arith.constant 1 : index
    %c0_50 = arith.constant 0 : index
    %c0_51 = arith.constant 0 : index
    %73 = vector.load %arg1[%c1_49, %c0_50, %c0_51] : memref<9x1x256xf32, #tpu.memory_space<vmem>>, vector<1x1x256xf32>
    %74 = vector.shape_cast %73 : vector<1x1x256xf32> to vector<1x256xf32>
    %75 = vector.broadcast %74 : vector<1x256xf32> to vector<8x256xf32>
    %76 = arith.mulf %72, %75 : vector<8x256xf32>
    %c8_52 = arith.constant 8 : index
    %c0_53 = arith.constant 0 : index
    %77 = vector.load %arg9[%c8_52, %c0_53] : memref<72x256xf32, #tpu.memory_space<vmem>>, vector<8x256xf32>
    tpu.vector_store %arg9[%c8_52, %c0_53], %76 {strides = array<i32>} : memref<72x256xf32, #tpu.memory_space<vmem>>, vector<8x256xf32>,
    %c15_i32_54 = arith.constant 15 : i32
    %78 = tpu.dynamic_rotate %65 by %c15_i32_54 dim 1 : vector<8x256xf32>, i32 -> vector<8x256xf32>
    %c2_55 = arith.constant 2 : index
    %c0_56 = arith.constant 0 : index
    %c0_57 = arith.constant 0 : index
    %79 = vector.load %arg1[%c2_55, %c0_56, %c0_57] : memref<9x1x256xf32, #tpu.memory_space<vmem>>, vector<1x1x256xf32>
    %80 = vector.shape_cast %79 : vector<1x1x256xf32> to vector<1x256xf32>
    %81 = vector.broadcast %80 : vector<1x256xf32> to vector<8x256xf32>
    %82 = arith.mulf %78, %81 : vector<8x256xf32>
    %c16_58 = arith.constant 16 : index
    %c0_59 = arith.constant 0 : index
    %83 = vector.load %arg9[%c16_58, %c0_59] : memref<72x256xf32, #tpu.memory_space<vmem>>, vector<8x256xf32>
    tpu.vector_store %arg9[%c16_58, %c0_59], %82 {strides = array<i32>} : memref<72x256xf32, #tpu.memory_space<vmem>>, vector<8x256xf32>,
    %c1_i32_60 = arith.constant 1 : i32
    %84 = tpu.dynamic_rotate %65 by %c1_i32_60 dim 1 : vector<8x256xf32>, i32 -> vector<8x256xf32>
    %c3_61 = arith.constant 3 : index
    %c0_62 = arith.constant 0 : index
    %c0_63 = arith.constant 0 : index
    %85 = vector.load %arg1[%c3_61, %c0_62, %c0_63] : memref<9x1x256xf32, #tpu.memory_space<vmem>>, vector<1x1x256xf32>
    %86 = vector.shape_cast %85 : vector<1x1x256xf32> to vector<1x256xf32>
    %87 = vector.broadcast %86 : vector<1x256xf32> to vector<8x256xf32>
    %88 = arith.mulf %84, %87 : vector<8x256xf32>
    %c24_64 = arith.constant 24 : index
    %c0_65 = arith.constant 0 : index
    %89 = vector.load %arg9[%c24_64, %c0_65] : memref<72x256xf32, #tpu.memory_space<vmem>>, vector<8x256xf32>
    tpu.vector_store %arg9[%c24_64, %c0_65], %88 {strides = array<i32>} : memref<72x256xf32, #tpu.memory_space<vmem>>, vector<8x256xf32>,
    %c4_66 = arith.constant 4 : index
    %c0_67 = arith.constant 0 : index
    %c0_68 = arith.constant 0 : index
    %90 = vector.load %arg1[%c4_66, %c0_67, %c0_68] : memref<9x1x256xf32, #tpu.memory_space<vmem>>, vector<1x1x256xf32>
    %91 = vector.shape_cast %90 : vector<1x1x256xf32> to vector<1x256xf32>
    %92 = vector.broadcast %91 : vector<1x256xf32> to vector<8x256xf32>
    %93 = arith.mulf %65, %92 : vector<8x256xf32>
    %c32_69 = arith.constant 32 : index
    %c0_70 = arith.constant 0 : index
    %94 = vector.load %arg9[%c32_69, %c0_70] : memref<72x256xf32, #tpu.memory_space<vmem>>, vector<8x256xf32>
    tpu.vector_store %arg9[%c32_69, %c0_70], %93 {strides = array<i32>} : memref<72x256xf32, #tpu.memory_space<vmem>>, vector<8x256xf32>,
    %c255_i32_71 = arith.constant 255 : i32
    %95 = tpu.dynamic_rotate %65 by %c255_i32_71 dim 1 : vector<8x256xf32>, i32 -> vector<8x256xf32>
    %c5_72 = arith.constant 5 : index
    %c0_73 = arith.constant 0 : index
    %c0_74 = arith.constant 0 : index
    %96 = vector.load %arg1[%c5_72, %c0_73, %c0_74] : memref<9x1x256xf32, #tpu.memory_space<vmem>>, vector<1x1x256xf32>
    %97 = vector.shape_cast %96 : vector<1x1x256xf32> to vector<1x256xf32>
    %98 = vector.broadcast %97 : vector<1x256xf32> to vector<8x256xf32>
    %99 = arith.mulf %95, %98 : vector<8x256xf32>
    %c40_75 = arith.constant 40 : index
    %c0_76 = arith.constant 0 : index
    %100 = vector.load %arg9[%c40_75, %c0_76] : memref<72x256xf32, #tpu.memory_space<vmem>>, vector<8x256xf32>
    tpu.vector_store %arg9[%c40_75, %c0_76], %99 {strides = array<i32>} : memref<72x256xf32, #tpu.memory_space<vmem>>, vector<8x256xf32>,
    %c241_i32_77 = arith.constant 241 : i32
    %101 = tpu.dynamic_rotate %65 by %c241_i32_77 dim 1 : vector<8x256xf32>, i32 -> vector<8x256xf32>
    %c6_78 = arith.constant 6 : index
    %c0_79 = arith.constant 0 : index
    %c0_80 = arith.constant 0 : index
    %102 = vector.load %arg1[%c6_78, %c0_79, %c0_80] : memref<9x1x256xf32, #tpu.memory_space<vmem>>, vector<1x1x256xf32>
    %103 = vector.shape_cast %102 : vector<1x1x256xf32> to vector<1x256xf32>
    %104 = vector.broadcast %103 : vector<1x256xf32> to vector<8x256xf32>
    %105 = arith.mulf %101, %104 : vector<8x256xf32>
    %c48_81 = arith.constant 48 : index
    %c0_82 = arith.constant 0 : index
    %106 = vector.load %arg9[%c48_81, %c0_82] : memref<72x256xf32, #tpu.memory_space<vmem>>, vector<8x256xf32>
    tpu.vector_store %arg9[%c48_81, %c0_82], %105 {strides = array<i32>} : memref<72x256xf32, #tpu.memory_space<vmem>>, vector<8x256xf32>,
    %c240_i32_83 = arith.constant 240 : i32
    %107 = tpu.dynamic_rotate %65 by %c240_i32_83 dim 1 : vector<8x256xf32>, i32 -> vector<8x256xf32>
    %c7_84 = arith.constant 7 : index
    %c0_85 = arith.constant 0 : index
    %c0_86 = arith.constant 0 : index
    %108 = vector.load %arg1[%c7_84, %c0_85, %c0_86] : memref<9x1x256xf32, #tpu.memory_space<vmem>>, vector<1x1x256xf32>
    %109 = vector.shape_cast %108 : vector<1x1x256xf32> to vector<1x256xf32>
    %110 = vector.broadcast %109 : vector<1x256xf32> to vector<8x256xf32>
    %111 = arith.mulf %107, %110 : vector<8x256xf32>
    %c56_87 = arith.constant 56 : index
    %c0_88 = arith.constant 0 : index
    %112 = vector.load %arg9[%c56_87, %c0_88] : memref<72x256xf32, #tpu.memory_space<vmem>>, vector<8x256xf32>
    tpu.vector_store %arg9[%c56_87, %c0_88], %111 {strides = array<i32>} : memref<72x256xf32, #tpu.memory_space<vmem>>, vector<8x256xf32>,
    %c239_i32_89 = arith.constant 239 : i32
    %113 = tpu.dynamic_rotate %65 by %c239_i32_89 dim 1 : vector<8x256xf32>, i32 -> vector<8x256xf32>
    %c8_90 = arith.constant 8 : index
    %c0_91 = arith.constant 0 : index
    %c0_92 = arith.constant 0 : index
    %114 = vector.load %arg1[%c8_90, %c0_91, %c0_92] : memref<9x1x256xf32, #tpu.memory_space<vmem>>, vector<1x1x256xf32>
    %115 = vector.shape_cast %114 : vector<1x1x256xf32> to vector<1x256xf32>
    %116 = vector.broadcast %115 : vector<1x256xf32> to vector<8x256xf32>
    %117 = arith.mulf %113, %116 : vector<8x256xf32>
    %c64_93 = arith.constant 64 : index
    %c0_94 = arith.constant 0 : index
    %118 = vector.load %arg9[%c64_93, %c0_94] : memref<72x256xf32, #tpu.memory_space<vmem>>, vector<8x256xf32>
    tpu.vector_store %arg9[%c64_93, %c0_94], %117 {strides = array<i32>} : memref<72x256xf32, #tpu.memory_space<vmem>>, vector<8x256xf32>,
    %c0_95 = arith.constant 0 : index
    %c0_96 = arith.constant 0 : index
    %119 = vector.load %arg6[%c0_95, %c0_96] : memref<8x72xf32, #tpu.memory_space<vmem>>, vector<8x72xf32>
    %c0_97 = arith.constant 0 : index
    %c0_98 = arith.constant 0 : index
    %120 = vector.load %arg9[%c0_97, %c0_98] : memref<72x256xf32, #tpu.memory_space<vmem>>, vector<72x256xf32>
    %cst_99 = arith.constant dense<0.000000e+00> : vector<8x256xf32>
    %121 = tpu.matmul %119, %120, %cst_99 {dimension_numbers = #tpu.dot_dimension_numbers<[1], [0], [0], [1], [0, 0, 1, 1], [], []>} : vector<8x72xf32>, vector<72x256xf32>, vector<8x256xf32> -> vector<8x256xf32>
    %c0_100 = arith.constant 0 : index
    %c0_101 = arith.constant 0 : index
    %122 = vector.load %arg7[%c0_100, %c0_101] : memref<8x1xf32, #tpu.memory_space<vmem>>, vector<8x1xf32>
    %123 = vector.broadcast %122 : vector<8x1xf32> to vector<8x256xf32>
    %124 = arith.addf %121, %123 : vector<8x256xf32>
    %cst_102 = arith.constant 0.000000e+00 : f32
    %125 = vector.broadcast %cst_102 : f32 to vector<8x256xf32>
    %126 = arith.maximumf %124, %125 : vector<8x256xf32>
    %c0_103 = arith.constant 0 : index
    %c0_104 = arith.constant 0 : index
    %c0_105 = arith.constant 0 : index
    %127 = vector.load %arg8[%c0_103, %c0_104, %c0_105] : memref<1x8x256xf32, #tpu.memory_space<vmem>>, vector<1x8x256xf32>
    %128 = vector.shape_cast %127 : vector<1x8x256xf32> to vector<8x256xf32>
    %129 = vector.shape_cast %126 : vector<8x256xf32> to vector<1x8x256xf32>
    tpu.vector_store %arg8[%c0_103, %c0_104, %c0_105], %129 {strides = array<i32>} : memref<1x8x256xf32, #tpu.memory_space<vmem>>, vector<1x8x256xf32>,
    return
  }
  func.func @transform_0(%arg0: i32) -> (i32, i32, i32) {
    %c0_i32 = arith.constant 0 : i32
    %c0_i32_0 = arith.constant 0 : i32
    %c0_i32_1 = arith.constant 0 : i32
    %c0_i32_2 = arith.constant 0 : i32
    return %c0_i32, %c0_i32_0, %c0_i32_1 : i32, i32, i32
  }
  func.func @transform_1(%arg0: i32) -> (i32, i32, i32) {
    %c0_i32 = arith.constant 0 : i32
    %c0_i32_0 = arith.constant 0 : i32
    %c0_i32_1 = arith.constant 0 : i32
    return %arg0, %c0_i32, %c0_i32_0 : i32, i32, i32
  }
  func.func @transform_2(%arg0: i32) -> (i32, i32, i32) {
    %c0_i32 = arith.constant 0 : i32
    %c0_i32_0 = arith.constant 0 : i32
    %c0_i32_1 = arith.constant 0 : i32
    return %arg0, %c0_i32, %c0_i32_0 : i32, i32, i32
  }
  func.func @transform_3(%arg0: i32) -> (i32, i32) {
    %c0_i32 = arith.constant 0 : i32
    %c0_i32_0 = arith.constant 0 : i32
    %c0_i32_1 = arith.constant 0 : i32
    return %c0_i32, %c0_i32_0 : i32, i32
  }
  func.func @transform_4(%arg0: i32) -> (i32, i32) {
    %c0_i32 = arith.constant 0 : i32
    %c0_i32_0 = arith.constant 0 : i32
    %c0_i32_1 = arith.constant 0 : i32
    return %c0_i32, %c0_i32_0 : i32, i32
  }
  func.func @transform_5(%arg0: i32) -> (i32, i32) {
    %c0_i32 = arith.constant 0 : i32
    %c0_i32_0 = arith.constant 0 : i32
    %c0_i32_1 = arith.constant 0 : i32
    return %c0_i32, %c0_i32_0 : i32, i32
  }
  func.func @transform_6(%arg0: i32) -> (i32, i32) {
    %c0_i32 = arith.constant 0 : i32
    %c0_i32_0 = arith.constant 0 : i32
    %c0_i32_1 = arith.constant 0 : i32
    return %c0_i32, %c0_i32_0 : i32, i32
  }
  func.func @transform_7(%arg0: i32) -> (i32, i32, i32) {
    %c0_i32 = arith.constant 0 : i32
    %c0_i32_0 = arith.constant 0 : i32
    %c0_i32_1 = arith.constant 0 : i32
    return %arg0, %c0_i32, %c0_i32_0 : i32, i32, i32
  }
}

</mosaic_0001>

<llo_original>
// kernel: tpu_custom_call.1
$region0: #{tpu_custom_call.1}
  #allocation0 [shape = 'u32[]', space=smem, size = 0x4, offset = 0x4, fixed_abs, tag = 'smem constant byte address 0x4 - core index']
  #allocation1 [shape = 'u32[144,128]{1,0:T(1,128)}', space=vmem, size = 0x12000, scoped, tag = 'internal scratch']
  #allocation2 [shape = 'f32[72,256]{1,0:T(8,128)}', space=vmem, size = 0x12000, scoped, tag = 'scratch operand']
  %s0 = inlined_call_operand.hbm [shape: f32[9,1,256], index: 0, kind: input, shape index: {}]
  %s1 = inlined_call_operand.hbm [shape: f32[2,8,256], index: 1, kind: input, shape index: {}]
  %s2 = inlined_call_operand.hbm [shape: f32[2,8,256], index: 2, kind: input, shape index: {}]
  %s3 = inlined_call_operand.vmem [shape: f32[8,72], index: 3, kind: input, shape index: {}]
  %s4 = inlined_call_operand.vmem [shape: f32[8,1], index: 4, kind: input, shape index: {}]
  %s5 = inlined_call_operand.vmem [shape: f32[8,72], index: 5, kind: input, shape index: {}]
  %s6 = inlined_call_operand.vmem [shape: f32[8,1], index: 6, kind: input, shape index: {}]
  %s7 = inlined_call_operand.hbm [shape: f32[2,8,256], index: 7, kind: output, shape index: {}]
  %s8 = sld [smem:[#allocation0]]
  $region73: #{tpu_custom_call.1} parent=0
    _
  %s10 = ssub.s32 1, %s8
  %s11 = scalar_select 0, %s10, %s8
  $region1: #{tpu_custom_call.1} parent=0
    #allocation3 [shape = 'u8[9216]{0}', space=vmem, size = 0x2400, scoped, tag = 'input window, operand 0, single buffered']
    #allocation4 [shape = 's32[2]{0}', space=sflag, size = 0x8, scoped, tag = 'scoped memory for tpu_custom_call.1']
    #allocation5 [shape = 's32[2]{0}', space=sflag, size = 0x8, scoped, tag = 'scoped memory for tpu_custom_call.1']
    #allocation6 [shape = 'u8[16384]{0}', space=vmem, size = 0x4000, scoped, tag = 'input window, operand 1']
    #allocation7 [shape = 's32[2]{0}', space=sflag, size = 0x8, scoped, tag = 'scoped memory for tpu_custom_call.1']
    #allocation8 [shape = 'u8[16384]{0}', space=vmem, size = 0x4000, scoped, tag = 'input window, operand 2']
    #allocation9 [shape = 'u8[16384]{0}', space=vmem, size = 0x4000, scoped, tag = 'output window, operand 0']
    %12 = vsyncpa [#allocation4], 0
    %13 = vsyncpa [#allocation7], 0
    %s14 = scalar_lea.sflag [#allocation7], 1
    %15 = vsyncpa %s14, 0
    %16 = vsyncpa [#allocation5], 0
    %s17 = scalar_lea.sflag [#allocation5], 1
    %18 = vsyncpa %s17, 0
    loop: start=0, step=1, limit=4
    $region2: #{tpu_custom_call.1} parent=1 // loop_pre_header
      _
    $region3: #{tpu_custom_call.1} parent=1 // loop_header
      %s20 = sphi 0, %s24
      %p21 = scmp.ge.s32.totalorder %s20, 4
      %s28 = sphi 0, %s28
      %s30 = sphi 0, %s28
      %s31 = sphi 0, %s30
      %s45 = sphi 0, %s31
      %s51 = sphi 0, %s53
      %s54 = sphi 0, %s51
      %s55 = sphi 0, %s54
      %s71 = sphi 0, %s55
      %s77 = sphi 0, %s79
      %s80 = sphi 0, %s77
      %s81 = sphi 0, %s80
      %s97 = sphi 0, %s81
      %s101 = sphi 0, %s101
      %s103 = sphi 0, %s101
      %s104 = sphi 0, %s103
      %s118 = sphi 0, %s104
      %s122 = sphi 0, %s122
      %s124 = sphi 0, %s122
      %s125 = sphi 0, %s124
      %s139 = sphi 0, %s125
      %s143 = sphi 0, %s143
      %s145 = sphi 0, %s143
      %s146 = sphi 0, %s145
      %s160 = sphi 0, %s146
      %s164 = sphi 0, %s164
      %s166 = sphi 0, %s164
      %s167 = sphi 0, %s166
      %s181 = sphi 0, %s167
      %s187 = sphi 0, %s189
      %s190 = sphi 0, %s187
      %s191 = sphi 0, %s190
      %s207 = sphi 0, %s191
    $region4: #{tpu_custom_call.1} parent=1 // loop_header_branch
      %23 = sbr.rel (%p21) target = $region8
    $region5: #{tpu_custom_call.1} parent=1 // loop_body
      %s25 = ssub.s32 %s20, 1
      %s26 = ssub.s32 %s20, 2
      %s27 = sadd.s32 %s20, 1
      %s29 = sadd.s32 %s28, 1
      %p32 = scmp.eq.s32.totalorder %s20, 1
      %p33 = scmp.ne.s32.totalorder %s28, %s30
      %p34 = scmp.eq.s32.totalorder %s20, 0
      %p35 = por %p33, %p34
      %p36 = scmp.ne.s32.totalorder %s28, %s30
      %p37 = scmp.eq.s32.totalorder %s25, 1
      %p38 = por %p36, %p37
      %p39 = scmp.ne.s32.totalorder %s30, %s31
      %p40 = scmp.eq.s32.totalorder %s25, 0
      %p41 = por %p39, %p40
      %p42 = scmp.ne.s32.totalorder %s30, %s31
      %p43 = scmp.eq.s32.totalorder %s26, 1
      %p44 = por %p42, %p43
      %p46 = scmp.ne.s32.totalorder %s31, %s45
      %p47 = scmp.eq.s32.totalorder %s26, 0
      %p48 = por %p46, %p47
      %s49 = ssub.s32 %s20, %s27
      %p50 = scmp.eq.s32.totalorder %s49, 0
      %s52 = sadd.s32 %s51, 1
      %s53 = scalar_select %p50, %s51, %s52
      %p56 = pneg %p50
      %p57 = scmp.eq.s32.totalorder %s20, 1
      %p58 = por %p56, %p57
      %p59 = scmp.ne.s32.totalorder %s51, %s54
      %p60 = scmp.eq.s32.totalorder %s20, 0
      %p61 = por %p59, %p60
      %p62 = scmp.ne.s32.totalorder %s51, %s54
      %p63 = scmp.eq.s32.totalorder %s25, 1
      %p64 = por %p62, %p63
      %p65 = scmp.ne.s32.totalorder %s54, %s55
      %p66 = scmp.eq.s32.totalorder %s25, 0
      %p67 = por %p65, %p66
      %p68 = scmp.ne.s32.totalorder %s54, %s55
      %p69 = scmp.eq.s32.totalorder %s26, 1
      %p70 = por %p68, %p69
      %p72 = scmp.ne.s32.totalorder %s55, %s71
      %p73 = scmp.eq.s32.totalorder %s26, 0
      %p74 = por %p72, %p73
      %s75 = ssub.s32 %s20, %s27
      %p76 = scmp.eq.s32.totalorder %s75, 0
      %s78 = sadd.s32 %s77, 1
      %s79 = scalar_select %p76, %s77, %s78
      %p82 = pneg %p76
      %p83 = scmp.eq.s32.totalorder %s20, 1
      %p84 = por %p82, %p83
      %p85 = scmp.ne.s32.totalorder %s77, %s80
      %p86 = scmp.eq.s32.totalorder %s20, 0
      %p87 = por %p85, %p86
      %p88 = scmp.ne.s32.totalorder %s77, %s80
      %p89 = scmp.eq.s32.totalorder %s25, 1
      %p90 = por %p88, %p89
      %p91 = scmp.ne.s32.totalorder %s80, %s81
      %p92 = scmp.eq.s32.totalorder %s25, 0
      %p93 = por %p91, %p92
      %p94 = scmp.ne.s32.totalorder %s80, %s81
      %p95 = scmp.eq.s32.totalorder %s26, 1
      %p96 = por %p94, %p95
      %p98 = scmp.ne.s32.totalorder %s81, %s97
      %p99 = scmp.eq.s32.totalorder %s26, 0
      %p100 = por %p98, %p99
      %s102 = sadd.s32 %s101, 1
      %p105 = scmp.eq.s32.totalorder %s20, 1
      %p106 = scmp.ne.s32.totalorder %s101, %s103
      %p107 = scmp.eq.s32.totalorder %s20, 0
      %p108 = por %p106, %p107
      %p109 = scmp.ne.s32.totalorder %s101, %s103
      %p110 = scmp.eq.s32.totalorder %s25, 1
      %p111 = por %p109, %p110
      %p112 = scmp.ne.s32.totalorder %s103, %s104
      %p113 = scmp.eq.s32.totalorder %s25, 0
      %p114 = por %p112, %p113
      %p115 = scmp.ne.s32.totalorder %s103, %s104
      %p116 = scmp.eq.s32.totalorder %s26, 1
      %p117 = por %p115, %p116
      %p119 = scmp.ne.s32.totalorder %s104, %s118
      %p120 = scmp.eq.s32.totalorder %s26, 0
      %p121 = por %p119, %p120
      %s123 = sadd.s32 %s122, 1
      %p126 = scmp.eq.s32.totalorder %s20, 1
      %p127 = scmp.ne.s32.totalorder %s122, %s124
      %p128 = scmp.eq.s32.totalorder %s20, 0
      %p129 = por %p127, %p128
      %p130 = scmp.ne.s32.totalorder %s122, %s124
      %p131 = scmp.eq.s32.totalorder %s25, 1
      %p132 = por %p130, %p131
      %p133 = scmp.ne.s32.totalorder %s124, %s125
      %p134 = scmp.eq.s32.totalorder %s25, 0
      %p135 = por %p133, %p134
      %p136 = scmp.ne.s32.totalorder %s124, %s125
      %p137 = scmp.eq.s32.totalorder %s26, 1
      %p138 = por %p136, %p137
      %p140 = scmp.ne.s32.totalorder %s125, %s139
      %p141 = scmp.eq.s32.totalorder %s26, 0
      %p142 = por %p140, %p141
      %s144 = sadd.s32 %s143, 1
      %p147 = scmp.eq.s32.totalorder %s20, 1
      %p148 = scmp.ne.s32.totalorder %s143, %s145
      %p149 = scmp.eq.s32.totalorder %s20, 0
      %p150 = por %p148, %p149
      %p151 = scmp.ne.s32.totalorder %s143, %s145
      %p152 = scmp.eq.s32.totalorder %s25, 1
      %p153 = por %p151, %p152
      %p154 = scmp.ne.s32.totalorder %s145, %s146
      %p155 = scmp.eq.s32.totalorder %s25, 0
      %p156 = por %p154, %p155
      %p157 = scmp.ne.s32.totalorder %s145, %s146
      %p158 = scmp.eq.s32.totalorder %s26, 1
      %p159 = por %p157, %p158
      %p161 = scmp.ne.s32.totalorder %s146, %s160
      %p162 = scmp.eq.s32.totalorder %s26, 0
      %p163 = por %p161, %p162
      %s165 = sadd.s32 %s164, 1
      %p168 = scmp.eq.s32.totalorder %s20, 1
      %p169 = scmp.ne.s32.totalorder %s164, %s166
      %p170 = scmp.eq.s32.totalorder %s20, 0
      %p171 = por %p169, %p170
      %p172 = scmp.ne.s32.totalorder %s164, %s166
      %p173 = scmp.eq.s32.totalorder %s25, 1
      %p174 = por %p172, %p173
      %p175 = scmp.ne.s32.totalorder %s166, %s167
      %p176 = scmp.eq.s32.totalorder %s25, 0
      %p177 = por %p175, %p176
      %p178 = scmp.ne.s32.totalorder %s166, %s167
      %p179 = scmp.eq.s32.totalorder %s26, 1
      %p180 = por %p178, %p179
      %p182 = scmp.ne.s32.totalorder %s167, %s181
      %p183 = scmp.eq.s32.totalorder %s26, 0
      %p184 = por %p182, %p183
      %s185 = ssub.s32 %s20, %s27
      %p186 = scmp.eq.s32.totalorder %s185, 0
      %s188 = sadd.s32 %s187, 1
      %s189 = scalar_select %p186, %s187, %s188
      %p192 = pneg %p186
      %p193 = scmp.eq.s32.totalorder %s20, 1
      %p194 = por %p192, %p193
      %p195 = scmp.ne.s32.totalorder %s187, %s190
      %p196 = scmp.eq.s32.totalorder %s20, 0
      %p197 = por %p195, %p196
      %p198 = scmp.ne.s32.totalorder %s187, %s190
      %p199 = scmp.eq.s32.totalorder %s25, 1
      %p200 = por %p198, %p199
      %p201 = scmp.ne.s32.totalorder %s190, %s191
      %p202 = scmp.eq.s32.totalorder %s25, 0
      %p203 = por %p201, %p202
      %p204 = scmp.ne.s32.totalorder %s190, %s191
      %p205 = scmp.eq.s32.totalorder %s26, 1
      %p206 = por %p204, %p205
      %p208 = scmp.ne.s32.totalorder %s191, %s207
      %p209 = scmp.eq.s32.totalorder %s26, 0
      %p210 = por %p208, %p209
      %p211 = scmp.le.s32.totalorder 1, %s20
      %p212 = scmp.lt.s32.totalorder %s20, 3
      %p213 = pnand %p211, %p212
      %p214 = pneg %p213
      // Predicated region
      $region9: #{tpu_custom_call.1} parent=5 // pred_check
        _
      $region10: #{tpu_custom_call.1} parent=5 // pred_check_branch
        %216 = sbr.rel (%p213) target = $region12
      $region11: #{tpu_custom_call.1} parent=5 // pred_region
        %s217 = ssub.s32 %s20, 1
        // Predicated region
        $region13: #{tpu_custom_call.1} parent=11 // pred_check
          %p218 = pneg %p41
        $region14: #{tpu_custom_call.1} parent=11 // pred_check_branch
          %220 = sbr.rel (%p218) target = $region16
        $region15: #{tpu_custom_call.1} parent=11 // pred_region
          %s222 = ssub.s32 288, 288
          %223 = vsyncadd [#allocation4], %s222
          %s224 = sshll.u32 [#allocation3], 4
          %s225 = int_to_ptr.vmem [resolvable:$true] %s224
          %230 = dma.hbm_to_vmem [thread:$0]  %s0, 288, %s225, [#allocation4], 32, 32, 2
        $region16: #{tpu_custom_call.1} parent=11 // pred_fallthru
          _
        // Predicated region
        $region17: #{tpu_custom_call.1} parent=11 // pred_check
          %p231 = pneg %p114
        $region18: #{tpu_custom_call.1} parent=11 // pred_check_branch
          %233 = sbr.rel (%p231) target = $region20
        $region19: #{tpu_custom_call.1} parent=11 // pred_region
          _
        $region20: #{tpu_custom_call.1} parent=11 // pred_fallthru
          _
        // Predicated region
        $region21: #{tpu_custom_call.1} parent=11 // pred_check
          %p234 = pneg %p135
        $region22: #{tpu_custom_call.1} parent=11 // pred_check_branch
          %236 = sbr.rel (%p234) target = $region24
        $region23: #{tpu_custom_call.1} parent=11 // pred_region
          _
        $region24: #{tpu_custom_call.1} parent=11 // pred_fallthru
          _
        // Predicated region
        $region25: #{tpu_custom_call.1} parent=11 // pred_check
          %p237 = pneg %p156
        $region26: #{tpu_custom_call.1} parent=11 // pred_check_branch
          %239 = sbr.rel (%p237) target = $region28
        $region27: #{tpu_custom_call.1} parent=11 // pred_region
          _
        $region28: #{tpu_custom_call.1} parent=11 // pred_fallthru
          _
        // Predicated region
        $region29: #{tpu_custom_call.1} parent=11 // pred_check
          %p240 = pneg %p177
        $region30: #{tpu_custom_call.1} parent=11 // pred_check_branch
          %242 = sbr.rel (%p240) target = $region32
        $region31: #{tpu_custom_call.1} parent=11 // pred_region
          _
        $region32: #{tpu_custom_call.1} parent=11 // pred_fallthru
          _
      $region12: #{tpu_custom_call.1} parent=5 // pred_fallthru
        _
      %p243 = scmp.lt.s32.totalorder %s20, 2
      // Predicated region
      $region33: #{tpu_custom_call.1} parent=5 // pred_check
        %p244 = pneg %p243
      $region34: #{tpu_custom_call.1} parent=5 // pred_check_branch
        %246 = sbr.rel (%p244) target = $region36
      $region35: #{tpu_custom_call.1} parent=5 // pred_region
        // Predicated region
        $region37: #{tpu_custom_call.1} parent=35 // pred_check
          %p247 = pneg %p61
        $region38: #{tpu_custom_call.1} parent=35 // pred_check_branch
          %249 = sbr.rel (%p247) target = $region40
        $region39: #{tpu_custom_call.1} parent=35 // pred_region
          %s250 = sand.u32 %s20, 1
          %s251 = scalar_lea.sflag [#allocation7], %s250
          %s252 = sand.u32 %s51, 1
          %s253 = smul.addr %s252, 16
          %s254 = scalar_lea.vmem [#allocation6], %s253
          %s256 = ssub.s32 256, 256
          %257 = vsyncadd %s251, %s256
          %s258 = smul.addr %s20, 2
          %s259 = smul.addr %s258, 128
          %s260 = scalar_lea.hbm %s1, %s259
          %s262 = sshll.u32 %s254, 4
          %s263 = int_to_ptr.vmem [resolvable:$true] %s262
          %265 = dma.hbm_to_vmem [thread:$0]  %s260, 256, %s263, %s251
        $region40: #{tpu_custom_call.1} parent=35 // pred_fallthru
          _
        // Predicated region
        $region41: #{tpu_custom_call.1} parent=35 // pred_check
          %p266 = pneg %p87
        $region42: #{tpu_custom_call.1} parent=35 // pred_check_branch
          %268 = sbr.rel (%p266) target = $region44
        $region43: #{tpu_custom_call.1} parent=35 // pred_region
          %s269 = sand.u32 %s20, 1
          %s270 = scalar_lea.sflag [#allocation7], %s269
          %s271 = sand.u32 %s77, 1
          %s272 = smul.addr %s271, 16
          %s273 = scalar_lea.vmem [#allocation8], %s272
          %s275 = ssub.s32 256, 256
          %276 = vsyncadd %s270, %s275
          %s277 = smul.addr %s20, 2
          %s278 = smul.addr %s277, 128
          %s279 = scalar_lea.hbm %s2, %s278
          %s281 = sshll.u32 %s273, 4
          %s282 = int_to_ptr.vmem [resolvable:$true] %s281
          %284 = dma.hbm_to_vmem [thread:$0]  %s279, 256, %s282, %s270
        $region44: #{tpu_custom_call.1} parent=35 // pred_fallthru
          _
      $region36: #{tpu_custom_call.1} parent=5 // pred_fallthru
        _
      %p285 = scmp.le.s32.totalorder 1, %s20
      %p286 = scmp.lt.s32.totalorder %s20, 3
      %p287 = pnand %p285, %p286
      %p288 = pneg %p287
      // Predicated region
      $region45: #{tpu_custom_call.1} parent=5 // pred_check
        _
      $region46: #{tpu_custom_call.1} parent=5 // pred_check_branch
        %290 = sbr.rel (%p287) target = $region48
      $region47: #{tpu_custom_call.1} parent=5 // pred_region
        %s291 = ssub.s32 %s20, 1
        // Predicated region
        $region49: #{tpu_custom_call.1} parent=47 // pred_check
          %p292 = pneg %p41
        $region50: #{tpu_custom_call.1} parent=47 // pred_check_branch
          %294 = sbr.rel (%p292) target = $region52
        $region51: #{tpu_custom_call.1} parent=47 // pred_region
          %295 = dma.done [#allocation4], 288
        $region52: #{tpu_custom_call.1} parent=47 // pred_fallthru
          _
        %s296 = sand.u32 %s25, 1
        %s297 = scalar_lea.sflag [#allocation7], %s296
        %s298 = sand.u32 %s54, 1
        %s299 = smul.addr %s298, 16
        %s300 = scalar_lea.vmem [#allocation6], %s299
        // Predicated region
        $region53: #{tpu_custom_call.1} parent=47 // pred_check
          %p301 = pneg %p67
        $region54: #{tpu_custom_call.1} parent=47 // pred_check_branch
          %303 = sbr.rel (%p301) target = $region56
        $region55: #{tpu_custom_call.1} parent=47 // pred_region
          %304 = dma.done %s297, 256
        $region56: #{tpu_custom_call.1} parent=47 // pred_fallthru
          _
        %s305 = sand.u32 %s25, 1
        %s306 = scalar_lea.sflag [#allocation7], %s305
        %s307 = sand.u32 %s80, 1
        %s308 = smul.addr %s307, 16
        %s309 = scalar_lea.vmem [#allocation8], %s308
        // Predicated region
        $region57: #{tpu_custom_call.1} parent=47 // pred_check
          %p310 = pneg %p93
        $region58: #{tpu_custom_call.1} parent=47 // pred_check_branch
          %312 = sbr.rel (%p310) target = $region60
        $region59: #{tpu_custom_call.1} parent=47 // pred_region
          %313 = dma.done %s306, 256
        $region60: #{tpu_custom_call.1} parent=47 // pred_fallthru
          _
        %p314 = pneg %p41
        %p315 = pneg %p38
        %s316 = sand.u32 %s25, 1
        %s317 = scalar_lea.sflag [#allocation7], %s316
        %s318 = sand.u32 %s54, 1
        %s319 = smul.addr %s318, 16
        %s320 = scalar_lea.vmem [#allocation6], %s319
        %p321 = pneg %p67
        %p322 = pneg %p64
        %s323 = sand.u32 %s25, 1
        %s324 = scalar_lea.sflag [#allocation7], %s323
        %s325 = sand.u32 %s80, 1
        %s326 = smul.addr %s325, 16
        %s327 = scalar_lea.vmem [#allocation8], %s326
        %p328 = pneg %p93
        %p329 = pneg %p90
        %p330 = pneg %p114
        %p331 = pneg %p111
        %p332 = pneg %p135
        %p333 = pneg %p132
        %p334 = pneg %p156
        %p335 = pneg %p153
        %p336 = pneg %p177
        %p337 = pneg %p174
        %p338 = pneg %p203
        %p339 = pneg %p200
        %s340 = sand.u32 %s190, 1
        %s341 = scalar_lea.sflag [#allocation5], %s340
        %s342 = sand.u32 %s190, 1
        %s343 = smul.addr %s342, 16
        %s344 = scalar_lea.vmem [#allocation9], %s343
        %v345 = vld [vmem:[%s300] sm:$0xff]
        %v346 = vld [vmem:[%s300 + $0x8] sm:$0xff]
        %v347 = vld [vmem:[%s309] sm:$0xff]
        %v348 = vld [vmem:[%s309 + $0x8] sm:$0xff]
        %v349 = vmul.f32 %v345, %v347
        %v350 = vmul.f32 %v346, %v348
        %351 = vrot.lane.b32.xlu0 %v349, 17
        %v352 = vpop.permute.xlu0 %351
        %353 = vrot.lane.b32.xlu0 %v350, 17
        %v354 = vpop.permute.xlu0 %353
        %v355 = vlaneseq
        %v356 = vand.u32 %v355, 127
        %vm357 = vcmp.lt.s32.totalorder %v356, 17
        %v358 = vsel %vm357, %v352, %v354
        %v359 = vsel %vm357, %v354, %v352
        %v360 = vld [vmem:[#allocation3] sm:$0x3]
        %v362 = vlaneseq
        %v363 = vshrl.u32 %v362, 7
        %v364 = vsub.s32 0, %v363
        %v365 = vrot.slane %v360, %v364
        %v366 = vlaneseq
        %v367 = vshrl.u32 %v366, 7
        %v368 = vsub.s32 1, %v367
        %v369 = vrot.slane %v360, %v368
        %v372 = vmul.f32 %v359, %v365
        %v373 = vmul.f32 %v358, %v369
        %374 = vst [vmem:[#allocation2] sm:$0xff] %v372
        %375 = vst [vmem:[#allocation2 + $0x8] sm:$0xff] %v373
        %376 = vrot.lane.b32.xlu0 %v349, 16
        %v377 = vpop.permute.xlu0 %376
        %378 = vrot.lane.b32.xlu0 %v350, 16
        %v379 = vpop.permute.xlu0 %378
        %vm380 = vcmp.lt.s32.totalorder %v356, 16
        %v381 = vsel %vm380, %v377, %v379
        %v382 = vsel %vm380, %v379, %v377
        %s383 = scalar_lea.vmem [#allocation3], 2
        %v384 = vld [vmem:[%s383] sm:$0x3]
        %v386 = vlaneseq
        %v387 = vshrl.u32 %v386, 7
        %v388 = vsub.s32 0, %v387
        %v389 = vrot.slane %v384, %v388
        %v390 = vlaneseq
        %v391 = vshrl.u32 %v390, 7
        %v392 = vsub.s32 1, %v391
        %v393 = vrot.slane %v384, %v392
        %v396 = vmul.f32 %v382, %v389
        %v397 = vmul.f32 %v381, %v393
        %398 = vst [vmem:[#allocation2 + $0x10] sm:$0xff] %v396
        %399 = vst [vmem:[#allocation2 + $0x18] sm:$0xff] %v397
        %400 = vrot.lane.b32.xlu0 %v349, 15
        %v401 = vpop.permute.xlu0 %400
        %402 = vrot.lane.b32.xlu0 %v350, 15
        %v403 = vpop.permute.xlu0 %402
        %vm404 = vcmp.lt.s32.totalorder %v356, 15
        %v405 = vsel %vm404, %v401, %v403
        %v406 = vsel %vm404, %v403, %v401
        %s407 = scalar_lea.vmem [#allocation3], 4
        %v408 = vld [vmem:[%s407] sm:$0x3]
        %v410 = vlaneseq
        %v411 = vshrl.u32 %v410, 7
        %v412 = vsub.s32 0, %v411
        %v413 = vrot.slane %v408, %v412
        %v414 = vlaneseq
        %v415 = vshrl.u32 %v414, 7
        %v416 = vsub.s32 1, %v415
        %v417 = vrot.slane %v408, %v416
        %v420 = vmul.f32 %v406, %v413
        %v421 = vmul.f32 %v405, %v417
        %422 = vst [vmem:[#allocation2 + $0x20] sm:$0xff] %v420
        %423 = vst [vmem:[#allocation2 + $0x28] sm:$0xff] %v421
        %424 = vrot.lane.b32.xlu0 %v349, 1
        %v425 = vpop.permute.xlu0 %424
        %426 = vrot.lane.b32.xlu0 %v350, 1
        %v427 = vpop.permute.xlu0 %426
        %vm428 = vcmp.lt.s32.totalorder %v356, 1
        %v429 = vsel %vm428, %v425, %v427
        %v430 = vsel %vm428, %v427, %v425
        %s431 = scalar_lea.vmem [#allocation3], 6
        %v432 = vld [vmem:[%s431] sm:$0x3]
        %v434 = vlaneseq
        %v435 = vshrl.u32 %v434, 7
        %v436 = vsub.s32 0, %v435
        %v437 = vrot.slane %v432, %v436
        %v438 = vlaneseq
        %v439 = vshrl.u32 %v438, 7
        %v440 = vsub.s32 1, %v439
        %v441 = vrot.slane %v432, %v440
        %v444 = vmul.f32 %v430, %v437
        %v445 = vmul.f32 %v429, %v441
        %446 = vst [vmem:[#allocation2 + $0x30] sm:$0xff] %v444
        %447 = vst [vmem:[#allocation2 + $0x38] sm:$0xff] %v445
        %s448 = scalar_lea.vmem [#allocation3], 8
        %v449 = vld [vmem:[%s448] sm:$0x3]
        %v451 = vlaneseq
        %v452 = vshrl.u32 %v451, 7
        %v453 = vsub.s32 0, %v452
        %v454 = vrot.slane %v449, %v453
        %v455 = vlaneseq
        %v456 = vshrl.u32 %v455, 7
        %v457 = vsub.s32 1, %v456
        %v458 = vrot.slane %v449, %v457
        %v461 = vmul.f32 %v349, %v454
        %v462 = vmul.f32 %v350, %v458
        %463 = vst [vmem:[#allocation2 + $0x40] sm:$0xff] %v461
        %464 = vst [vmem:[#allocation2 + $0x48] sm:$0xff] %v462
        %465 = vrot.lane.b32.xlu0 %v349, 127
        %v466 = vpop.permute.xlu0 %465
        %467 = vrot.lane.b32.xlu0 %v350, 127
        %v468 = vpop.permute.xlu0 %467
        %vm469 = vcmp.lt.s32.totalorder %v356, 127
        %v470 = vsel %vm469, %v466, %v468
        %v471 = vsel %vm469, %v468, %v466
        %s472 = scalar_lea.vmem [#allocation3], 10
        %v473 = vld [vmem:[%s472] sm:$0x3]
        %v475 = vlaneseq
        %v476 = vshrl.u32 %v475, 7
        %v477 = vsub.s32 0, %v476
        %v478 = vrot.slane %v473, %v477
        %v479 = vlaneseq
        %v480 = vshrl.u32 %v479, 7
        %v481 = vsub.s32 1, %v480
        %v482 = vrot.slane %v473, %v481
        %v485 = vmul.f32 %v470, %v478
        %v486 = vmul.f32 %v471, %v482
        %487 = vst [vmem:[#allocation2 + $0x50] sm:$0xff] %v485
        %488 = vst [vmem:[#allocation2 + $0x58] sm:$0xff] %v486
        %489 = vrot.lane.b32.xlu0 %v349, 113
        %v490 = vpop.permute.xlu0 %489
        %491 = vrot.lane.b32.xlu0 %v350, 113
        %v492 = vpop.permute.xlu0 %491
        %vm493 = vcmp.lt.s32.totalorder %v356, 113
        %v494 = vsel %vm493, %v490, %v492
        %v495 = vsel %vm493, %v492, %v490
        %s496 = scalar_lea.vmem [#allocation3], 12
        %v497 = vld [vmem:[%s496] sm:$0x3]
        %v499 = vlaneseq
        %v500 = vshrl.u32 %v499, 7
        %v501 = vsub.s32 0, %v500
        %v502 = vrot.slane %v497, %v501
        %v503 = vlaneseq
        %v504 = vshrl.u32 %v503, 7
        %v505 = vsub.s32 1, %v504
        %v506 = vrot.slane %v497, %v505
        %v509 = vmul.f32 %v494, %v502
        %v510 = vmul.f32 %v495, %v506
        %511 = vst [vmem:[#allocation2 + $0x60] sm:$0xff] %v509
        %512 = vst [vmem:[#allocation2 + $0x68] sm:$0xff] %v510
        %513 = vrot.lane.b32.xlu0 %v349, 112
        %v514 = vpop.permute.xlu0 %513
        %515 = vrot.lane.b32.xlu0 %v350, 112
        %v516 = vpop.permute.xlu0 %515
        %vm517 = vcmp.lt.s32.totalorder %v356, 112
        %v518 = vsel %vm517, %v514, %v516
        %v519 = vsel %vm517, %v516, %v514
        %s520 = scalar_lea.vmem [#allocation3], 14
        %v521 = vld [vmem:[%s520] sm:$0x3]
        %v523 = vlaneseq
        %v524 = vshrl.u32 %v523, 7
        %v525 = vsub.s32 0, %v524
        %v526 = vrot.slane %v521, %v525
        %v527 = vlaneseq
        %v528 = vshrl.u32 %v527, 7
        %v529 = vsub.s32 1, %v528
        %v530 = vrot.slane %v521, %v529
        %v533 = vmul.f32 %v518, %v526
        %v534 = vmul.f32 %v519, %v530
        %535 = vst [vmem:[#allocation2 + $0x70] sm:$0xff] %v533
        %536 = vst [vmem:[#allocation2 + $0x78] sm:$0xff] %v534
        %537 = vrot.lane.b32.xlu0 %v349, 111
        %v538 = vpop.permute.xlu0 %537
        %539 = vrot.lane.b32.xlu0 %v350, 111
        %v540 = vpop.permute.xlu0 %539
        %vm541 = vcmp.lt.s32.totalorder %v356, 111
        %v542 = vsel %vm541, %v538, %v540
        %v543 = vsel %vm541, %v540, %v538
        %s544 = scalar_lea.vmem [#allocation3], 16
        %v545 = vld [vmem:[%s544] sm:$0x3]
        %v547 = vlaneseq
        %v548 = vshrl.u32 %v547, 7
        %v549 = vsub.s32 0, %v548
        %v550 = vrot.slane %v545, %v549
        %v551 = vlaneseq
        %v552 = vshrl.u32 %v551, 7
        %v553 = vsub.s32 1, %v552
        %v554 = vrot.slane %v545, %v553
        %v557 = vmul.f32 %v542, %v550
        %v558 = vmul.f32 %v543, %v554
        %559 = vst [vmem:[#allocation2 + $0x80] sm:$0xff] %v557
        %560 = vst [vmem:[#allocation2 + $0x88] sm:$0xff] %v558
        %v561 = vld [vmem:[%s3] sm:$0xff]
        %v562 = vld [vmem:[#allocation2] sm:$0xff]
        %v563 = vld [vmem:[#allocation2 + $0x8] sm:$0xff]
        %v564 = vld [vmem:[#allocation2 + $0x10] sm:$0xff]
        %v565 = vld [vmem:[#allocation2 + $0x18] sm:$0xff]
        %v566 = vld [vmem:[#allocation2 + $0x20] sm:$0xff]
        %v567 = vld [vmem:[#allocation2 + $0x28] sm:$0xff]
        %v568 = vld [vmem:[#allocation2 + $0x30] sm:$0xff]
        %v569 = vld [vmem:[#allocation2 + $0x38] sm:$0xff]
        %v570 = vld [vmem:[#allocation2 + $0x40] sm:$0xff]
        %v571 = vld [vmem:[#allocation2 + $0x48] sm:$0xff]
        %v572 = vld [vmem:[#allocation2 + $0x50] sm:$0xff]
        %v573 = vld [vmem:[#allocation2 + $0x58] sm:$0xff]
        %v574 = vld [vmem:[#allocation2 + $0x60] sm:$0xff]
        %v575 = vld [vmem:[#allocation2 + $0x68] sm:$0xff]
        %v576 = vld [vmem:[#allocation2 + $0x70] sm:$0xff]
        %v577 = vld [vmem:[#allocation2 + $0x78] sm:$0xff]
        %v578 = vld [vmem:[#allocation2 + $0x80] sm:$0xff]
        %v579 = vld [vmem:[#allocation2 + $0x88] sm:$0xff]
        %v580 = vld [vmem:[%s4] sm:$0xff]
        %582 = vset.pattern.permute.xlu0 0
        %583 = vperm.xlu0 %582, %v580
        %v584 = vpop.permute.xlu0 %583
        %vm586 = vcmask 588800
        %v588 = vsel %vm586, %v561, 0
        %590 = vmatprep.subr.mxu0 %v563
        %591 = vmatpush1.msra.mxu0 %v562
        %592 = vmatprep.subr.mxu0 %v565
        %593 = vmatpush1.msra.mxu0 %v564
        %594 = vmatprep.subr.mxu0 %v567
        %595 = vmatpush1.msra.mxu0 %v566
        %596 = vmatprep.subr.mxu0 %v569
        %597 = vmatpush1.msra.mxu0 %v568
        %598 = vmatprep.subr.mxu0 %v571
        %599 = vmatpush1.msra.mxu0 %v570
        %600 = vmatprep.subr.mxu0 %v573
        %601 = vmatpush1.msra.mxu0 %v572
        %602 = vmatprep.subr.mxu0 %v575
        %603 = vmatpush1.msra.mxu0 %v574
        %604 = vmatprep.subr.mxu0 %v577
        %605 = vmatpush1.msra.mxu0 %v576
        %606 = vmatprep.subr.mxu0 %v579
        %607 = vmatpush1.msra.mxu0 %v578
        %608 = vmatprep.subr.mxu0 0.0
        %609 = vmatpush1.msra.mxu0 0.0
        %610 = vmatprep.subr.mxu0 0.0
        %611 = vmatpush1.msra.mxu0 0.0
        %612 = vmatprep.subr.mxu0 0.0
        %613 = vmatpush1.msra.mxu0 0.0
        %614 = vmatprep.subr.mxu0 0.0
        %615 = vmatpush1.msra.mxu0 0.0
        %616 = vmatprep.subr.mxu0 0.0
        %617 = vmatpush1.msra.mxu0 0.0
        %618 = vmatprep.subr.mxu0 0.0
        %619 = vmatpush1.msra.mxu0 0.0
        %620 = vmatprep.subr.mxu0 0.0
        %621 = vmatpush1.msra.mxu0 0.0
        %622 = vmatprep.subr.mxu0 0.0
        %623 = vmatpush1.msra.mxu0 0.0
        %624 = vmatprep.subr.mxu0 0.0
        %625 = vmatpush1.msra.mxu0 0.0
        %626 = vmatprep.subr.mxu0 0.0
        %627 = vmatpush1.msra.mxu0 0.0
        %628 = vmatprep.subr.mxu0 0.0
        %629 = vmatpush1.msra.mxu0 0.0
        %630 = vmatprep.subr.mxu0 0.0
        %631 = vmatpush1.msra.mxu0 0.0
        %632 = vmatprep.subr.mxu0 0.0
        %633 = vmatpush1.msra.mxu0 0.0
        %634 = vmatprep.subr.mxu0 0.0
        %635 = vmatpush1.msra.mxu0 0.0
        %636 = vmatprep.subr.mxu0 0.0
        %637 = vmatpush1.msra.mxu0 0.0
        %638 = vmatprep.subr.mxu0 0.0
        %639 = vmatpush1.msra.mxu0 0.0
        %640 = vmatprep.subr.mxu0 0.0
        %641 = vmatpush1.msra.mxu0 0.0
        %642 = vmatprep.subr.mxu0 0.0
        %643 = vmatpush1.msra.mxu0 0.0
        %644 = vmatprep.subr.mxu0 0.0
        %645 = vmatpush1.msra.mxu0 0.0
        %646 = vmatprep.subr.mxu0 0.0
        %647 = vmatpush1.msra.mxu0 0.0
        %648 = vmatprep.subr.mxu0 0.0
        %649 = vmatpush1.msra.mxu0 0.0
        %650 = vmatprep.subr.mxu0 0.0
        %651 = vmatpush1.msra.mxu0 0.0
        %652 = vmatprep.subr.mxu0 0.0
        %653 = vmatpush1.msra.mxu0 0.0
        %654 = vmatprep.mubr.f32.mxu0 0.0
        %655 = vmatmul.mubr.f32.gmra.mrb[0].mxu0 %v588
        %v656 = vpop.f32.mrb[0].mxu0
        %v657 = vadd.f32 %v584, %v656
        %v658 = vpop.f32.mrb[0].mxu0
        %v659 = vadd.f32 %v584, %v658
        %660 = vdwg.mxu0
        %v661 = vmax.f32 %v657, 0.0
        %v662 = vmax.f32 %v659, 0.0
        %663 = vrot.lane.b32.xlu0 %v661, 17
        %v664 = vpop.permute.xlu0 %663
        %665 = vrot.lane.b32.xlu0 %v662, 17
        %v666 = vpop.permute.xlu0 %665
        %v667 = vsel %vm357, %v664, %v666
        %v668 = vsel %vm357, %v666, %v664
        %v669 = vld [vmem:[#allocation3] sm:$0x3]
        %v671 = vlaneseq
        %v672 = vshrl.u32 %v671, 7
        %v673 = vsub.s32 0, %v672
        %v674 = vrot.slane %v669, %v673
        %v675 = vlaneseq
        %v676 = vshrl.u32 %v675, 7
        %v677 = vsub.s32 1, %v676
        %v678 = vrot.slane %v669, %v677
        %v681 = vmul.f32 %v668, %v674
        %v682 = vmul.f32 %v667, %v678
        %683 = vst [vmem:[#allocation2] sm:$0xff] %v681
        %684 = vst [vmem:[#allocation2 + $0x8] sm:$0xff] %v682
        %685 = vrot.lane.b32.xlu0 %v661, 16
        %v686 = vpop.permute.xlu0 %685
        %687 = vrot.lane.b32.xlu0 %v662, 16
        %v688 = vpop.permute.xlu0 %687
        %v689 = vsel %vm380, %v686, %v688
        %v690 = vsel %vm380, %v688, %v686
        %v691 = vld [vmem:[%s383] sm:$0x3]
        %v693 = vlaneseq
        %v694 = vshrl.u32 %v693, 7
        %v695 = vsub.s32 0, %v694
        %v696 = vrot.slane %v691, %v695
        %v697 = vlaneseq
        %v698 = vshrl.u32 %v697, 7
        %v699 = vsub.s32 1, %v698
        %v700 = vrot.slane %v691, %v699
        %v703 = vmul.f32 %v690, %v696
        %v704 = vmul.f32 %v689, %v700
        %705 = vst [vmem:[#allocation2 + $0x10] sm:$0xff] %v703
        %706 = vst [vmem:[#allocation2 + $0x18] sm:$0xff] %v704
        %707 = vrot.lane.b32.xlu0 %v661, 15
        %v708 = vpop.permute.xlu0 %707
        %709 = vrot.lane.b32.xlu0 %v662, 15
        %v710 = vpop.permute.xlu0 %709
        %v711 = vsel %vm404, %v708, %v710
        %v712 = vsel %vm404, %v710, %v708
        %v713 = vld [vmem:[%s407] sm:$0x3]
        %v715 = vlaneseq
        %v716 = vshrl.u32 %v715, 7
        %v717 = vsub.s32 0, %v716
        %v718 = vrot.slane %v713, %v717
        %v719 = vlaneseq
        %v720 = vshrl.u32 %v719, 7
        %v721 = vsub.s32 1, %v720
        %v722 = vrot.slane %v713, %v721
        %v725 = vmul.f32 %v712, %v718
        %v726 = vmul.f32 %v711, %v722
        %727 = vst [vmem:[#allocation2 + $0x20] sm:$0xff] %v725
        %728 = vst [vmem:[#allocation2 + $0x28] sm:$0xff] %v726
        %729 = vrot.lane.b32.xlu0 %v661, 1
        %v730 = vpop.permute.xlu0 %729
        %731 = vrot.lane.b32.xlu0 %v662, 1
        %v732 = vpop.permute.xlu0 %731
        %v733 = vsel %vm428, %v730, %v732
        %v734 = vsel %vm428, %v732, %v730
        %v735 = vld [vmem:[%s431] sm:$0x3]
        %v737 = vlaneseq
        %v738 = vshrl.u32 %v737, 7
        %v739 = vsub.s32 0, %v738
        %v740 = vrot.slane %v735, %v739
        %v741 = vlaneseq
        %v742 = vshrl.u32 %v741, 7
        %v743 = vsub.s32 1, %v742
        %v744 = vrot.slane %v735, %v743
        %v747 = vmul.f32 %v734, %v740
        %v748 = vmul.f32 %v733, %v744
        %749 = vst [vmem:[#allocation2 + $0x30] sm:$0xff] %v747
        %750 = vst [vmem:[#allocation2 + $0x38] sm:$0xff] %v748
        %v751 = vld [vmem:[%s448] sm:$0x3]
        %v753 = vlaneseq
        %v754 = vshrl.u32 %v753, 7
        %v755 = vsub.s32 0, %v754
        %v756 = vrot.slane %v751, %v755
        %v757 = vlaneseq
        %v758 = vshrl.u32 %v757, 7
        %v759 = vsub.s32 1, %v758
        %v760 = vrot.slane %v751, %v759
        %v763 = vmul.f32 %v661, %v756
        %v764 = vmul.f32 %v662, %v760
        %765 = vst [vmem:[#allocation2 + $0x40] sm:$0xff] %v763
        %766 = vst [vmem:[#allocation2 + $0x48] sm:$0xff] %v764
        %767 = vrot.lane.b32.xlu0 %v661, 127
        %v768 = vpop.permute.xlu0 %767
        %769 = vrot.lane.b32.xlu0 %v662, 127
        %v770 = vpop.permute.xlu0 %769
        %v771 = vsel %vm469, %v768, %v770
        %v772 = vsel %vm469, %v770, %v768
        %v773 = vld [vmem:[%s472] sm:$0x3]
        %v775 = vlaneseq
        %v776 = vshrl.u32 %v775, 7
        %v777 = vsub.s32 0, %v776
        %v778 = vrot.slane %v773, %v777
        %v779 = vlaneseq
        %v780 = vshrl.u32 %v779, 7
        %v781 = vsub.s32 1, %v780
        %v782 = vrot.slane %v773, %v781
        %v785 = vmul.f32 %v771, %v778
        %v786 = vmul.f32 %v772, %v782
        %787 = vst [vmem:[#allocation2 + $0x50] sm:$0xff] %v785
        %788 = vst [vmem:[#allocation2 + $0x58] sm:$0xff] %v786
        %789 = vrot.lane.b32.xlu0 %v661, 113
        %v790 = vpop.permute.xlu0 %789
        %791 = vrot.lane.b32.xlu0 %v662, 113
        %v792 = vpop.permute.xlu0 %791
        %v793 = vsel %vm493, %v790, %v792
        %v794 = vsel %vm493, %v792, %v790
        %v795 = vld [vmem:[%s496] sm:$0x3]
        %v797 = vlaneseq
        %v798 = vshrl.u32 %v797, 7
        %v799 = vsub.s32 0, %v798
        %v800 = vrot.slane %v795, %v799
        %v801 = vlaneseq
        %v802 = vshrl.u32 %v801, 7
        %v803 = vsub.s32 1, %v802
        %v804 = vrot.slane %v795, %v803
        %v807 = vmul.f32 %v793, %v800
        %v808 = vmul.f32 %v794, %v804
        %809 = vst [vmem:[#allocation2 + $0x60] sm:$0xff] %v807
        %810 = vst [vmem:[#allocation2 + $0x68] sm:$0xff] %v808
        %811 = vrot.lane.b32.xlu0 %v661, 112
        %v812 = vpop.permute.xlu0 %811
        %813 = vrot.lane.b32.xlu0 %v662, 112
        %v814 = vpop.permute.xlu0 %813
        %v815 = vsel %vm517, %v812, %v814
        %v816 = vsel %vm517, %v814, %v812
        %v817 = vld [vmem:[%s520] sm:$0x3]
        %v819 = vlaneseq
        %v820 = vshrl.u32 %v819, 7
        %v821 = vsub.s32 0, %v820
        %v822 = vrot.slane %v817, %v821
        %v823 = vlaneseq
        %v824 = vshrl.u32 %v823, 7
        %v825 = vsub.s32 1, %v824
        %v826 = vrot.slane %v817, %v825
        %v829 = vmul.f32 %v815, %v822
        %v830 = vmul.f32 %v816, %v826
        %831 = vst [vmem:[#allocation2 + $0x70] sm:$0xff] %v829
        %832 = vst [vmem:[#allocation2 + $0x78] sm:$0xff] %v830
        %833 = vrot.lane.b32.xlu0 %v661, 111
        %v834 = vpop.permute.xlu0 %833
        %835 = vrot.lane.b32.xlu0 %v662, 111
        %v836 = vpop.permute.xlu0 %835
        %v837 = vsel %vm541, %v834, %v836
        %v838 = vsel %vm541, %v836, %v834
        %v839 = vld [vmem:[%s544] sm:$0x3]
        %v841 = vlaneseq
        %v842 = vshrl.u32 %v841, 7
        %v843 = vsub.s32 0, %v842
        %v844 = vrot.slane %v839, %v843
        %v845 = vlaneseq
        %v846 = vshrl.u32 %v845, 7
        %v847 = vsub.s32 1, %v846
        %v848 = vrot.slane %v839, %v847
        %v851 = vmul.f32 %v837, %v844
        %v852 = vmul.f32 %v838, %v848
        %853 = vst [vmem:[#allocation2 + $0x80] sm:$0xff] %v851
        %854 = vst [vmem:[#allocation2 + $0x88] sm:$0xff] %v852
        %v855 = vld [vmem:[%s5] sm:$0xff]
        %v856 = vld [vmem:[#allocation2] sm:$0xff]
        %v857 = vld [vmem:[#allocation2 + $0x8] sm:$0xff]
        %v858 = vld [vmem:[#allocation2 + $0x10] sm:$0xff]
        %v859 = vld [vmem:[#allocation2 + $0x18] sm:$0xff]
        %v860 = vld [vmem:[#allocation2 + $0x20] sm:$0xff]
        %v861 = vld [vmem:[#allocation2 + $0x28] sm:$0xff]
        %v862 = vld [vmem:[#allocation2 + $0x30] sm:$0xff]
        %v863 = vld [vmem:[#allocation2 + $0x38] sm:$0xff]
        %v864 = vld [vmem:[#allocation2 + $0x40] sm:$0xff]
        %v865 = vld [vmem:[#allocation2 + $0x48] sm:$0xff]
        %v866 = vld [vmem:[#allocation2 + $0x50] sm:$0xff]
        %v867 = vld [vmem:[#allocation2 + $0x58] sm:$0xff]
        %v868 = vld [vmem:[#allocation2 + $0x60] sm:$0xff]
        %v869 = vld [vmem:[#allocation2 + $0x68] sm:$0xff]
        %v870 = vld [vmem:[#allocation2 + $0x70] sm:$0xff]
        %v871 = vld [vmem:[#allocation2 + $0x78] sm:$0xff]
        %v872 = vld [vmem:[#allocation2 + $0x80] sm:$0xff]
        %v873 = vld [vmem:[#allocation2 + $0x88] sm:$0xff]
        %v874 = vld [vmem:[%s6] sm:$0xff]
        %876 = vset.pattern.permute.xlu0 0
        %877 = vperm.xlu0 %876, %v874
        %v878 = vpop.permute.xlu0 %877
        %v881 = vsel %vm586, %v855, 0
        %883 = vmatprep.subr.mxu0 %v857
        %884 = vmatpush1.msra.mxu0 %v856
        %885 = vmatprep.subr.mxu0 %v859
        %886 = vmatpush1.msra.mxu0 %v858
        %887 = vmatprep.subr.mxu0 %v861
        %888 = vmatpush1.msra.mxu0 %v860
        %889 = vmatprep.subr.mxu0 %v863
        %890 = vmatpush1.msra.mxu0 %v862
        %891 = vmatprep.subr.mxu0 %v865
        %892 = vmatpush1.msra.mxu0 %v864
        %893 = vmatprep.subr.mxu0 %v867
        %894 = vmatpush1.msra.mxu0 %v866
        %895 = vmatprep.subr.mxu0 %v869
        %896 = vmatpush1.msra.mxu0 %v868
        %897 = vmatprep.subr.mxu0 %v871
        %898 = vmatpush1.msra.mxu0 %v870
        %899 = vmatprep.subr.mxu0 %v873
        %900 = vmatpush1.msra.mxu0 %v872
        %901 = vmatprep.subr.mxu0 0.0
        %902 = vmatpush1.msra.mxu0 0.0
        %903 = vmatprep.subr.mxu0 0.0
        %904 = vmatpush1.msra.mxu0 0.0
        %905 = vmatprep.subr.mxu0 0.0
        %906 = vmatpush1.msra.mxu0 0.0
        %907 = vmatprep.subr.mxu0 0.0
        %908 = vmatpush1.msra.mxu0 0.0
        %909 = vmatprep.subr.mxu0 0.0
        %910 = vmatpush1.msra.mxu0 0.0
        %911 = vmatprep.subr.mxu0 0.0
        %912 = vmatpush1.msra.mxu0 0.0
        %913 = vmatprep.subr.mxu0 0.0
        %914 = vmatpush1.msra.mxu0 0.0
        %915 = vmatprep.subr.mxu0 0.0
        %916 = vmatpush1.msra.mxu0 0.0
        %917 = vmatprep.subr.mxu0 0.0
        %918 = vmatpush1.msra.mxu0 0.0
        %919 = vmatprep.subr.mxu0 0.0
        %920 = vmatpush1.msra.mxu0 0.0
        %921 = vmatprep.subr.mxu0 0.0
        %922 = vmatpush1.msra.mxu0 0.0
        %923 = vmatprep.subr.mxu0 0.0
        %924 = vmatpush1.msra.mxu0 0.0
        %925 = vmatprep.subr.mxu0 0.0
        %926 = vmatpush1.msra.mxu0 0.0
        %927 = vmatprep.subr.mxu0 0.0
        %928 = vmatpush1.msra.mxu0 0.0
        %929 = vmatprep.subr.mxu0 0.0
        %930 = vmatpush1.msra.mxu0 0.0
        %931 = vmatprep.subr.mxu0 0.0
        %932 = vmatpush1.msra.mxu0 0.0
        %933 = vmatprep.subr.mxu0 0.0
        %934 = vmatpush1.msra.mxu0 0.0
        %935 = vmatprep.subr.mxu0 0.0
        %936 = vmatpush1.msra.mxu0 0.0
        %937 = vmatprep.subr.mxu0 0.0
        %938 = vmatpush1.msra.mxu0 0.0
        %939 = vmatprep.subr.mxu0 0.0
        %940 = vmatpush1.msra.mxu0 0.0
        %941 = vmatprep.subr.mxu0 0.0
        %942 = vmatpush1.msra.mxu0 0.0
        %943 = vmatprep.subr.mxu0 0.0
        %944 = vmatpush1.msra.mxu0 0.0
        %945 = vmatprep.subr.mxu0 0.0
        %946 = vmatpush1.msra.mxu0 0.0
        %947 = vmatprep.mubr.f32.mxu0 0.0
        %948 = vmatmul.mubr.f32.gmra.mrb[0].mxu0 %v881
        %v949 = vpop.f32.mrb[0].mxu0
        %v950 = vadd.f32 %v878, %v949
        %v951 = vpop.f32.mrb[0].mxu0
        %v952 = vadd.f32 %v878, %v951
        %953 = vdwg.mxu0
        %v954 = vmax.f32 %v950, 0.0
        %v955 = vmax.f32 %v952, 0.0
        %956 = vst [vmem:[%s344] sm:$0xff] %v954
        %957 = vst [vmem:[%s344 + $0x8] sm:$0xff] %v955
        %s958 = sand.u32 %s190, 1
        %s959 = scalar_lea.sflag [#allocation5], %s958
        %s960 = sand.u32 %s190, 1
        %s961 = smul.addr %s960, 16
        %s962 = scalar_lea.vmem [#allocation9], %s961
        // Predicated region
        $region61: #{tpu_custom_call.1} parent=47 // pred_check
          %p963 = pneg %p200
        $region62: #{tpu_custom_call.1} parent=47 // pred_check_branch
          %965 = sbr.rel (%p963) target = $region64
        $region63: #{tpu_custom_call.1} parent=47 // pred_region
          %s967 = ssub.s32 256, 256
          %968 = vsyncadd %s959, %s967
          %s969 = smul.addr %s25, 2
          %s970 = smul.addr %s969, 128
          %s971 = scalar_lea.hbm %s7, %s970
          %s973 = sshll.u32 %s962, 4
          %s974 = int_to_ptr.vmem [resolvable:$true] %s973
          %976 = dma.vmem_to_hbm [thread:$0]  %s974, 256, %s971, %s959
        $region64: #{tpu_custom_call.1} parent=47 // pred_fallthru
          _
      $region48: #{tpu_custom_call.1} parent=5 // pred_fallthru
        _
      %p977 = scmp.le.s32.totalorder 2, %s20
      // Predicated region
      $region65: #{tpu_custom_call.1} parent=5 // pred_check
        %p978 = pneg %p977
      $region66: #{tpu_custom_call.1} parent=5 // pred_check_branch
        %980 = sbr.rel (%p978) target = $region68
      $region67: #{tpu_custom_call.1} parent=5 // pred_region
        %s981 = ssub.s32 %s20, 2
        // Predicated region
        $region69: #{tpu_custom_call.1} parent=67 // pred_check
          %p982 = pneg %p206
        $region70: #{tpu_custom_call.1} parent=67 // pred_check_branch
          %984 = sbr.rel (%p982) target = $region72
        $region71: #{tpu_custom_call.1} parent=67 // pred_region
          %s985 = sand.u32 %s191, 1
          %s986 = scalar_lea.sflag [#allocation5], %s985
          %s987 = sand.u32 %s191, 1
          %s988 = smul.addr %s987, 16
          %s989 = scalar_lea.vmem [#allocation9], %s988
          %990 = dma.done %s986, 256
        $region72: #{tpu_custom_call.1} parent=67 // pred_fallthru
          _
      $region68: #{tpu_custom_call.1} parent=5 // pred_fallthru
        _
    $region6: #{tpu_custom_call.1} parent=1 // loop_footer
      %s24 = sadd.s32 1, %s20
    $region7: #{tpu_custom_call.1} parent=1 // loop_footer_branch
      %19 = sbr.rel target = $region3
    $region8: #{tpu_custom_call.1} parent=1 // loop_exit
      _
    %991 = vsyncpa [#allocation4], 1
    %s992 = scalar_lea.sflag [#allocation4], 1
    %993 = vsyncpa %s992, 1
    %994 = vsyncpa [#allocation7], 1
    %s995 = scalar_lea.sflag [#allocation7], 1
    %996 = vsyncpa %s995, 1
    %997 = vsyncpa [#allocation5], 1
    %s998 = scalar_lea.sflag [#allocation5], 1
    %999 = vsyncpa %s998, 1

</llo_original>
